<compile_context>
chip_gen: v7x
topology: tpu7x:2x2x1
jax: 0.10.0
libtpu: 0.0.40
codegen_flags: <defaults>
</compile_context>

<pallas_src>
import numpy as np
import jax
import jax.numpy as jnp
from jax.experimental import pallas as pl
from jax.experimental.pallas import tpu as pltpu

INPUT_SIZE = 32          # X_train.shape[1] stand-in (free parameter of the module)
H1, H2, H3, H4 = 128, 64, 32, 16
OUT = 1
BT_MAX = 1024            # large-batch M tile (multiple of 256 -> aligned on every MXU)


def _mlp_kernel(x_ref, w1_ref, b1_ref, w2_ref, b2_ref, w3_ref, b3_ref,
                w4_ref, b4_ref, w5_ref, b5_ref, o_ref):
    # x_ref : (BT, INPUT_SIZE) bf16   one batch tile
    # wN_ref: (K, N) bf16 pre-transposed weights; bN_ref: (1, N) f32
    # w5_ref: (1, H4) f32 (final layer as a row vector, used on the VPU)
    # o_ref : (BT, OUT) f32
    h = jnp.dot(x_ref[...], w1_ref[...],
                preferred_element_type=jnp.float32) + b1_ref[...]
    h = jnp.maximum(h, 0.0).astype(jnp.bfloat16)
    h = jnp.dot(h, w2_ref[...],
                preferred_element_type=jnp.float32) + b2_ref[...]
    h = jnp.maximum(h, 0.0).astype(jnp.bfloat16)
    h = jnp.dot(h, w3_ref[...],
                preferred_element_type=jnp.float32) + b3_ref[...]
    h = jnp.maximum(h, 0.0).astype(jnp.bfloat16)
    h = jnp.dot(h, w4_ref[...],
                preferred_element_type=jnp.float32) + b4_ref[...]
    h = jnp.maximum(h, 0.0)                                   # (BT, 16) f32
    # Final N=1 layer off the MXU: VPU multiply + 16-lane reduction (XLU slot).
    o_ref[...] = jnp.sum(h * w5_ref[...], axis=-1, keepdims=True) + b5_ref[...]


def _choose_tile(b):
    """Adaptive batch tile: single padded tile for small B, BT_MAX for large B."""
    if b <= BT_MAX:
        return max(16, ((b + 15) // 16) * 16)   # one grid step, bf16-sublane aligned
    return BT_MAX


@jax.jit
def simplenn_forward(x, params):
    """x: (B, INPUT_SIZE) float32 -> (B, 1) float32 (matches SimpleNN.forward)."""
    w1, b1, w2, b2, w3, b3, w4, b4, w5, b5 = params
    B = x.shape[0]

    bt = _choose_tile(B)                      # static (shape-dependent) Python branch
    Bp = ((B + bt - 1) // bt) * bt
    x = x.astype(jnp.float32)
    if Bp != B:
        x = jnp.pad(x, ((0, Bp - B), (0, 0)))
    x = x.astype(jnp.bfloat16)                # bf16 MXU operands, halved HBM bytes

    # One-time weight re-layout: torch Linear stores (out, in); use (in, out)
    # so every layer is a row-major (BT, K) @ (K, N) MXU matmul.  bf16 operands,
    # f32 biases / f32 accumulation.
    w1k, b1k = w1.T.astype(jnp.bfloat16), b1.reshape(1, H1).astype(jnp.float32)
    w2k, b2k = w2.T.astype(jnp.bfloat16), b2.reshape(1, H2).astype(jnp.float32)
    w3k, b3k = w3.T.astype(jnp.bfloat16), b3.reshape(1, H3).astype(jnp.float32)
    w4k, b4k = w4.T.astype(jnp.bfloat16), b4.reshape(1, H4).astype(jnp.float32)
    # Final layer stays f32 (it runs on the VPU, not the MXU).
    w5k, b5k = w5.reshape(1, H4).astype(jnp.float32), b5.reshape(1, OUT).astype(jnp.float32)

    const = lambda i: (0, 0)   # weights/biases: same (resident) block every step

    out = pl.pallas_call(
        _mlp_kernel,
        out_shape=jax.ShapeDtypeStruct((Bp, OUT), jnp.float32),
        grid=(Bp // bt,),
        in_specs=[
            pl.BlockSpec((bt, INPUT_SIZE), lambda i: (i, 0)),
            pl.BlockSpec((INPUT_SIZE, H1), const), pl.BlockSpec((1, H1), const),
            pl.BlockSpec((H1, H2), const),         pl.BlockSpec((1, H2), const),
            pl.BlockSpec((H2, H3), const),         pl.BlockSpec((1, H3), const),
            pl.BlockSpec((H3, H4), const),         pl.BlockSpec((1, H4), const),
            pl.BlockSpec((1, H4), const),          pl.BlockSpec((1, OUT), const),
        ],
        out_specs=pl.BlockSpec((bt, OUT), lambda i: (i, 0)),
        compiler_params=pltpu.CompilerParams(
            dimension_semantics=("parallel",)),     # v7x: shard batch over 2 TCs
    )(x, w1k, b1k, w2k, b2k, w3k, b3k, w4k, b4k, w5k, b5k)

    return out[:B]


# ---------------- deterministic parameter init (PyTorch Linear default-style) ----------------
def _uniform(key, shape, fan_in):
    bound = 1.0 / np.sqrt(fan_in)
    return jax.random.uniform(key, shape, jnp.float32, -bound, bound)


def init_params(key):
    ks = jax.random.split(key, 10)
    w1 = _uniform(ks[0], (H1, INPUT_SIZE), INPUT_SIZE)
    b1 = _uniform(ks[1], (H1,), INPUT_SIZE)
    w2 = _uniform(ks[2], (H2, H1), H1)
    b2 = _uniform(ks[3], (H2,), H1)
    w3 = _uniform(ks[4], (H3, H2), H2)
    b3 = _uniform(ks[5], (H3,), H2)
    w4 = _uniform(ks[6], (H4, H3), H3)
    b4 = _uniform(ks[7], (H4,), H3)
    w5 = _uniform(ks[8], (OUT, H4), H4)
    b5 = _uniform(ks[9], (OUT,), H4)
    return (w1, b1, w2, b2, w3, b3, w4, b4, w5, b5)


# ---------------- pure-JAX reference (mirrors the PyTorch forward, f32) ----------------
def reference_forward(x, params):
    w1, b1, w2, b2, w3, b3, w4, b4, w5, b5 = params
    hp = jax.lax.Precision.HIGHEST
    y = jnp.maximum(jnp.dot(x, w1.T, precision=hp) + b1, 0.0)
    y = jnp.maximum(jnp.dot(y, w2.T, precision=hp) + b2, 0.0)
    y = jnp.maximum(jnp.dot(y, w3.T, precision=hp) + b3, 0.0)
    y = jnp.maximum(jnp.dot(y, w4.T, precision=hp) + b4, 0.0)
    return jnp.dot(y, w5.T, precision=hp) + b5


if __name__ == "__main__":
    key = jax.random.PRNGKey(0)
    pkey, xkey = jax.random.split(key)
    params = init_params(pkey)
    x = jax.random.normal(xkey, (2, INPUT_SIZE), jnp.float32)

    out = simplenn_forward(x, params)
    out = jax.block_until_ready(out)

    ref = reference_forward(x, params)
    assert out.shape == (2, OUT), out.shape
    # Tolerance accommodates the intentional bf16 MXU operands (f32 accumulation).
    np.testing.assert_allclose(np.asarray(out), np.asarray(ref), rtol=2e-2, atol=2e-2)
    print("KERNEL_OK")
</pallas_src>

<mosaic_0001>
module attributes {stable_mosaic.version = 11 : i64} {
  func.func @_mlp_kernel(%arg0: i32, %arg1: memref<16x32xbf16, #tpu.memory_space<vmem>>, %arg2: memref<32x128xbf16, #tpu.memory_space<vmem>>, %arg3: memref<1x128xf32, #tpu.memory_space<vmem>>, %arg4: memref<128x64xbf16, #tpu.memory_space<vmem>>, %arg5: memref<1x64xf32, #tpu.memory_space<vmem>>, %arg6: memref<64x32xbf16, #tpu.memory_space<vmem>>, %arg7: memref<1x32xf32, #tpu.memory_space<vmem>>, %arg8: memref<32x16xbf16, #tpu.memory_space<vmem>>, %arg9: memref<1x16xf32, #tpu.memory_space<vmem>>, %arg10: memref<1x16xf32, #tpu.memory_space<vmem>>, %arg11: memref<1x1xf32, #tpu.memory_space<vmem>>, %arg12: memref<16x1xf32, #tpu.memory_space<vmem>>) attributes {dimension_semantics = [#tpu.dimension_semantics<parallel>], iteration_bounds = array<i64: 1>, scalar_prefetch = 0 : i64, scratch_operands = 0 : i64, tpu.core_type = #tpu.core_type<tc>, window_params = [{transform_indices = @transform_0, window_bounds = array<i64: 16, 32>}, {pipeline_mode = #tpu.pipeline_mode<synchronous>, transform_indices = @transform_1, window_bounds = array<i64: 32, 128>}, {pipeline_mode = #tpu.pipeline_mode<synchronous>, transform_indices = @transform_2, window_bounds = array<i64: 1, 128>}, {pipeline_mode = #tpu.pipeline_mode<synchronous>, transform_indices = @transform_3, window_bounds = array<i64: 128, 64>}, {pipeline_mode = #tpu.pipeline_mode<synchronous>, transform_indices = @transform_4, window_bounds = array<i64: 1, 64>}, {pipeline_mode = #tpu.pipeline_mode<synchronous>, transform_indices = @transform_5, window_bounds = array<i64: 64, 32>}, {pipeline_mode = #tpu.pipeline_mode<synchronous>, transform_indices = @transform_6, window_bounds = array<i64: 1, 32>}, {pipeline_mode = #tpu.pipeline_mode<synchronous>, transform_indices = @transform_7, window_bounds = array<i64: 32, 16>}, {pipeline_mode = #tpu.pipeline_mode<synchronous>, transform_indices = @transform_8, window_bounds = array<i64: 1, 16>}, {pipeline_mode = #tpu.pipeline_mode<synchronous>, transform_indices = @transform_9, window_bounds = array<i64: 1, 16>}, {pipeline_mode = #tpu.pipeline_mode<synchronous>, transform_indices = @transform_10, window_bounds = array<i64: 1, 1>}, {transform_indices = @transform_11, window_bounds = array<i64: 16, 1>}]} {
    %c0 = arith.constant 0 : index
    %c0_0 = arith.constant 0 : index
    %0 = vector.load %arg1[%c0, %c0_0] : memref<16x32xbf16, #tpu.memory_space<vmem>>, vector<16x32xbf16>
    %c0_1 = arith.constant 0 : index
    %c0_2 = arith.constant 0 : index
    %1 = vector.load %arg2[%c0_1, %c0_2] : memref<32x128xbf16, #tpu.memory_space<vmem>>, vector<32x128xbf16>
    %cst = arith.constant dense<0.000000e+00> : vector<16x128xf32>
    %2 = tpu.matmul %0, %1, %cst {dimension_numbers = #tpu.dot_dimension_numbers<[1], [0], [0], [1], [0, 0, 1, 1], [], []>} : vector<16x32xbf16>, vector<32x128xbf16>, vector<16x128xf32> -> vector<16x128xf32>
    %c0_3 = arith.constant 0 : index
    %c0_4 = arith.constant 0 : index
    %3 = vector.load %arg3[%c0_3, %c0_4] : memref<1x128xf32, #tpu.memory_space<vmem>>, vector<1x128xf32>
    %4 = vector.broadcast %3 : vector<1x128xf32> to vector<16x128xf32>
    %5 = arith.addf %2, %4 : vector<16x128xf32>
    %cst_5 = arith.constant 0.000000e+00 : f32
    %6 = vector.broadcast %cst_5 : f32 to vector<16x128xf32>
    %7 = arith.maximumf %5, %6 : vector<16x128xf32>
    %8 = arith.truncf %7 : vector<16x128xf32> to vector<16x128xbf16>
    %c0_6 = arith.constant 0 : index
    %c0_7 = arith.constant 0 : index
    %9 = vector.load %arg4[%c0_6, %c0_7] : memref<128x64xbf16, #tpu.memory_space<vmem>>, vector<128x64xbf16>
    %cst_8 = arith.constant dense<0.000000e+00> : vector<16x64xf32>
    %10 = tpu.matmul %8, %9, %cst_8 {dimension_numbers = #tpu.dot_dimension_numbers<[1], [0], [0], [1], [0, 0, 1, 1], [], []>} : vector<16x128xbf16>, vector<128x64xbf16>, vector<16x64xf32> -> vector<16x64xf32>
    %c0_9 = arith.constant 0 : index
    %c0_10 = arith.constant 0 : index
    %11 = vector.load %arg5[%c0_9, %c0_10] : memref<1x64xf32, #tpu.memory_space<vmem>>, vector<1x64xf32>
    %12 = vector.broadcast %11 : vector<1x64xf32> to vector<16x64xf32>
    %13 = arith.addf %10, %12 : vector<16x64xf32>
    %cst_11 = arith.constant 0.000000e+00 : f32
    %14 = vector.broadcast %cst_11 : f32 to vector<16x64xf32>
    %15 = arith.maximumf %13, %14 : vector<16x64xf32>
    %16 = arith.truncf %15 : vector<16x64xf32> to vector<16x64xbf16>
    %c0_12 = arith.constant 0 : index
    %c0_13 = arith.constant 0 : index
    %17 = vector.load %arg6[%c0_12, %c0_13] : memref<64x32xbf16, #tpu.memory_space<vmem>>, vector<64x32xbf16>
    %cst_14 = arith.constant dense<0.000000e+00> : vector<16x32xf32>
    %18 = tpu.matmul %16, %17, %cst_14 {dimension_numbers = #tpu.dot_dimension_numbers<[1], [0], [0], [1], [0, 0, 1, 1], [], []>} : vector<16x64xbf16>, vector<64x32xbf16>, vector<16x32xf32> -> vector<16x32xf32>
    %c0_15 = arith.constant 0 : index
    %c0_16 = arith.constant 0 : index
    %19 = vector.load %arg7[%c0_15, %c0_16] : memref<1x32xf32, #tpu.memory_space<vmem>>, vector<1x32xf32>
    %20 = vector.broadcast %19 : vector<1x32xf32> to vector<16x32xf32>
    %21 = arith.addf %18, %20 : vector<16x32xf32>
    %cst_17 = arith.constant 0.000000e+00 : f32
    %22 = vector.broadcast %cst_17 : f32 to vector<16x32xf32>
    %23 = arith.maximumf %21, %22 : vector<16x32xf32>
    %24 = arith.truncf %23 : vector<16x32xf32> to vector<16x32xbf16>
    %c0_18 = arith.constant 0 : index
    %c0_19 = arith.constant 0 : index
    %25 = vector.load %arg8[%c0_18, %c0_19] : memref<32x16xbf16, #tpu.memory_space<vmem>>, vector<32x16xbf16>
    %cst_20 = arith.constant dense<0.000000e+00> : vector<16x16xf32>
    %26 = tpu.matmul %24, %25, %cst_20 {dimension_numbers = #tpu.dot_dimension_numbers<[1], [0], [0], [1], [0, 0, 1, 1], [], []>} : vector<16x32xbf16>, vector<32x16xbf16>, vector<16x16xf32> -> vector<16x16xf32>
    %c0_21 = arith.constant 0 : index
    %c0_22 = arith.constant 0 : index
    %27 = vector.load %arg9[%c0_21, %c0_22] : memref<1x16xf32, #tpu.memory_space<vmem>>, vector<1x16xf32>
    %28 = vector.broadcast %27 : vector<1x16xf32> to vector<16x16xf32>
    %29 = arith.addf %26, %28 : vector<16x16xf32>
    %cst_23 = arith.constant 0.000000e+00 : f32
    %30 = vector.broadcast %cst_23 : f32 to vector<16x16xf32>
    %31 = arith.maximumf %29, %30 : vector<16x16xf32>
    %c0_24 = arith.constant 0 : index
    %c0_25 = arith.constant 0 : index
    %32 = vector.load %arg10[%c0_24, %c0_25] : memref<1x16xf32, #tpu.memory_space<vmem>>, vector<1x16xf32>
    %33 = vector.broadcast %32 : vector<1x16xf32> to vector<16x16xf32>
    %34 = arith.mulf %31, %33 : vector<16x16xf32>
    %cst_26 = arith.constant dense<0.000000e+00> : vector<16xf32>
    %35 = vector.multi_reduction <add>, %34, %cst_26 [1] : vector<16x16xf32> to vector<16xf32>
    %36 = vector.shape_cast %35 : vector<16xf32> to vector<16x1xf32>
    %c0_27 = arith.constant 0 : index
    %c0_28 = arith.constant 0 : index
    %37 = vector.load %arg11[%c0_27, %c0_28] : memref<1x1xf32, #tpu.memory_space<vmem>>, vector<1x1xf32>
    %38 = vector.broadcast %37 : vector<1x1xf32> to vector<16x1xf32>
    %39 = arith.addf %36, %38 : vector<16x1xf32>
    %c0_29 = arith.constant 0 : index
    %c0_30 = arith.constant 0 : index
    %40 = vector.load %arg12[%c0_29, %c0_30] : memref<16x1xf32, #tpu.memory_space<vmem>>, vector<16x1xf32>
    tpu.vector_store %arg12[%c0_29, %c0_30], %39 {strides = array<i32>} : memref<16x1xf32, #tpu.memory_space<vmem>>, vector<16x1xf32>,
    return
  }
  func.func @transform_0(%arg0: i32) -> (i32, i32) {
    %c0_i32 = arith.constant 0 : i32
    %c0_i32_0 = arith.constant 0 : i32
    return %arg0, %c0_i32 : i32, i32
  }
  func.func @transform_1(%arg0: i32) -> (i32, i32) {
    %c0_i32 = arith.constant 0 : i32
    %c0_i32_0 = arith.constant 0 : i32
    %c0_i32_1 = arith.constant 0 : i32
    return %c0_i32, %c0_i32_0 : i32, i32
  }
  func.func @transform_2(%arg0: i32) -> (i32, i32) {
    %c0_i32 = arith.constant 0 : i32
    %c0_i32_0 = arith.constant 0 : i32
    %c0_i32_1 = arith.constant 0 : i32
    return %c0_i32, %c0_i32_0 : i32, i32
  }
  func.func @transform_3(%arg0: i32) -> (i32, i32) {
    %c0_i32 = arith.constant 0 : i32
    %c0_i32_0 = arith.constant 0 : i32
    %c0_i32_1 = arith.constant 0 : i32
    return %c0_i32, %c0_i32_0 : i32, i32
  }
  func.func @transform_4(%arg0: i32) -> (i32, i32) {
    %c0_i32 = arith.constant 0 : i32
    %c0_i32_0 = arith.constant 0 : i32
    %c0_i32_1 = arith.constant 0 : i32
    return %c0_i32, %c0_i32_0 : i32, i32
  }
  func.func @transform_5(%arg0: i32) -> (i32, i32) {
    %c0_i32 = arith.constant 0 : i32
    %c0_i32_0 = arith.constant 0 : i32
    %c0_i32_1 = arith.constant 0 : i32
    return %c0_i32, %c0_i32_0 : i32, i32
  }
  func.func @transform_6(%arg0: i32) -> (i32, i32) {
    %c0_i32 = arith.constant 0 : i32
    %c0_i32_0 = arith.constant 0 : i32
    %c0_i32_1 = arith.constant 0 : i32
    return %c0_i32, %c0_i32_0 : i32, i32
  }
  func.func @transform_7(%arg0: i32) -> (i32, i32) {
    %c0_i32 = arith.constant 0 : i32
    %c0_i32_0 = arith.constant 0 : i32
    %c0_i32_1 = arith.constant 0 : i32
    return %c0_i32, %c0_i32_0 : i32, i32
  }
  func.func @transform_8(%arg0: i32) -> (i32, i32) {
    %c0_i32 = arith.constant 0 : i32
    %c0_i32_0 = arith.constant 0 : i32
    %c0_i32_1 = arith.constant 0 : i32
    return %c0_i32, %c0_i32_0 : i32, i32
  }
  func.func @transform_9(%arg0: i32) -> (i32, i32) {
    %c0_i32 = arith.constant 0 : i32
    %c0_i32_0 = arith.constant 0 : i32
    %c0_i32_1 = arith.constant 0 : i32
    return %c0_i32, %c0_i32_0 : i32, i32
  }
  func.func @transform_10(%arg0: i32) -> (i32, i32) {
    %c0_i32 = arith.constant 0 : i32
    %c0_i32_0 = arith.constant 0 : i32
    %c0_i32_1 = arith.constant 0 : i32
    return %c0_i32, %c0_i32_0 : i32, i32
  }
  func.func @transform_11(%arg0: i32) -> (i32, i32) {
    %c0_i32 = arith.constant 0 : i32
    %c0_i32_0 = arith.constant 0 : i32
    return %arg0, %c0_i32 : i32, i32
  }
}

</mosaic_0001>

<llo_original>
// kernel: simplenn_forward.1
$region0: #{simplenn_forward.1}
  #allocation0 [shape = 'u32[]', space=smem, size = 0x4, offset = 0x4, fixed_abs, tag = 'smem constant byte address 0x4 - core index']
  #allocation1 [shape = 'u32[144,128]{1,0:T(1,128)}', space=vmem, size = 0x12000, scoped, tag = 'internal scratch']
  #allocation2 [shape = 'f32[1,1]{1,0:T(1,128)S(1)}', space=vmem, size = 0x200, scoped, tag = 'scoped memory for simplenn_forward.1']
  %s0 = inlined_call_operand.vmem [shape: bf16[16,32], index: 0, kind: input, shape index: {}]
  %s1 = inlined_call_operand.vmem [shape: bf16[32,128], index: 1, kind: input, shape index: {}]
  %s2 = inlined_call_operand.vmem [shape: f32[1,128], index: 2, kind: input, shape index: {}]
  %s3 = inlined_call_operand.vmem [shape: bf16[128,64], index: 3, kind: input, shape index: {}]
  %s4 = inlined_call_operand.vmem [shape: f32[1,64], index: 4, kind: input, shape index: {}]
  %s5 = inlined_call_operand.vmem [shape: bf16[64,32], index: 5, kind: input, shape index: {}]
  %s6 = inlined_call_operand.vmem [shape: f32[1,32], index: 6, kind: input, shape index: {}]
  %s7 = inlined_call_operand.vmem [shape: bf16[32,16], index: 7, kind: input, shape index: {}]
  %s8 = inlined_call_operand.vmem [shape: f32[1,16], index: 8, kind: input, shape index: {}]
  %s9 = inlined_call_operand.vmem [shape: f32[1,16], index: 9, kind: input, shape index: {}]
  %s10 = inlined_call_operand.<no memory space> [shape: f32[1,1], index: 10, kind: input, shape index: {}]
  %s11 = inlined_call_operand.vmem [shape: f32[16,1], index: 11, kind: output, shape index: {}]
  %s12 = sld [smem:[#allocation0]]
  $region54: #{simplenn_forward.1} parent=0
    _
  %s14 = ssub.s32 1, %s12
  %s15 = scalar_select 0, %s14, %s12
  %v16 = vstv %s10
  %17 = vst [vmem:[#allocation2] sm:$0x1] %v16
  // Predicated region
  $region2: #{simplenn_forward.1} parent=0 // pred_check
    _
  $region3: #{simplenn_forward.1} parent=0 // pred_check_branch
    %19 = sbr.rel (0) target = $region5
  $region4: #{simplenn_forward.1} parent=0 // pred_region
    _
  $region5: #{simplenn_forward.1} parent=0 // pred_fallthru
    _
  // Predicated region
  $region6: #{simplenn_forward.1} parent=0 // pred_check
    _
  $region7: #{simplenn_forward.1} parent=0 // pred_check_branch
    %21 = sbr.rel (0) target = $region9
  $region8: #{simplenn_forward.1} parent=0 // pred_region
    _
  $region9: #{simplenn_forward.1} parent=0 // pred_fallthru
    _
  // Predicated region
  $region10: #{simplenn_forward.1} parent=0 // pred_check
    _
  $region11: #{simplenn_forward.1} parent=0 // pred_check_branch
    %23 = sbr.rel (0) target = $region13
  $region12: #{simplenn_forward.1} parent=0 // pred_region
    _
  $region13: #{simplenn_forward.1} parent=0 // pred_fallthru
    _
  // Predicated region
  $region14: #{simplenn_forward.1} parent=0 // pred_check
    _
  $region15: #{simplenn_forward.1} parent=0 // pred_check_branch
    %25 = sbr.rel (0) target = $region17
  $region16: #{simplenn_forward.1} parent=0 // pred_region
    _
  $region17: #{simplenn_forward.1} parent=0 // pred_fallthru
    _
  // Predicated region
  $region18: #{simplenn_forward.1} parent=0 // pred_check
    _
  $region19: #{simplenn_forward.1} parent=0 // pred_check_branch
    %27 = sbr.rel (0) target = $region21
  $region20: #{simplenn_forward.1} parent=0 // pred_region
    _
  $region21: #{simplenn_forward.1} parent=0 // pred_fallthru
    _
  // Predicated region
  $region22: #{simplenn_forward.1} parent=0 // pred_check
    _
  $region23: #{simplenn_forward.1} parent=0 // pred_check_branch
    %29 = sbr.rel (0) target = $region25
  $region24: #{simplenn_forward.1} parent=0 // pred_region
    _
  $region25: #{simplenn_forward.1} parent=0 // pred_fallthru
    _
  // Predicated region
  $region26: #{simplenn_forward.1} parent=0 // pred_check
    _
  $region27: #{simplenn_forward.1} parent=0 // pred_check_branch
    %31 = sbr.rel (0) target = $region29
  $region28: #{simplenn_forward.1} parent=0 // pred_region
    _
  $region29: #{simplenn_forward.1} parent=0 // pred_fallthru
    _
  // Predicated region
  $region30: #{simplenn_forward.1} parent=0 // pred_check
    _
  $region31: #{simplenn_forward.1} parent=0 // pred_check_branch
    %33 = sbr.rel (0) target = $region33
  $region32: #{simplenn_forward.1} parent=0 // pred_region
    _
  $region33: #{simplenn_forward.1} parent=0 // pred_fallthru
    _
  // Predicated region
  $region34: #{simplenn_forward.1} parent=0 // pred_check
    _
  $region35: #{simplenn_forward.1} parent=0 // pred_check_branch
    %35 = sbr.rel (0) target = $region37
  $region36: #{simplenn_forward.1} parent=0 // pred_region
    _
  $region37: #{simplenn_forward.1} parent=0 // pred_fallthru
    _
  // Predicated region
  $region38: #{simplenn_forward.1} parent=0 // pred_check
    _
  $region39: #{simplenn_forward.1} parent=0 // pred_check_branch
    %37 = sbr.rel (0) target = $region41
  $region40: #{simplenn_forward.1} parent=0 // pred_region
    _
  $region41: #{simplenn_forward.1} parent=0 // pred_fallthru
    _
  // Predicated region
  $region42: #{simplenn_forward.1} parent=0 // pred_check
    _
  $region43: #{simplenn_forward.1} parent=0 // pred_check_branch
    %39 = sbr.rel (0) target = $region45
  $region44: #{simplenn_forward.1} parent=0 // pred_region
    _
  $region45: #{simplenn_forward.1} parent=0 // pred_fallthru
    _
  %v41 = vld [vmem:[%s0] sm:$0xf]
  %v42 = vld [vmem:[%s0 + $0x4] sm:$0xf]
  %v43 = vld [vmem:[%s1] sm:$0xf]
  %v44 = vld [vmem:[%s1 + $0x4] sm:$0xf]
  %v45 = vld [vmem:[%s1 + $0x8] sm:$0xf]
  %v46 = vld [vmem:[%s1 + $0xc] sm:$0xf]
  %v47 = vld [vmem:[%s2] sm:$0x1]
  %v49 = vlaneseq
  %v50 = vshrl.u32 %v49, 7
  %v51 = vsub.s32 0, %v50
  %v52 = vrot.slane %v47, %v51
  %v56 = vunpack.c.l.b16 %v41
  %v57 = vunpack.c.l.b16 %v42
  %v58 = vpack.c.b16 %v57, %v56
  %v63 = vunpack.c.l.b16 %v43
  %v64 = vunpack.c.l.b16 %v44
  %v65 = vunpack.c.l.b16 %v45
  %v66 = vunpack.c.l.b16 %v46
  %v67 = vpack.c.b16 %v64, %v63
  %v68 = vpack.c.b16 %v66, %v65
  %vm71 = vcmask 261120
  %v73 = vsel %vm71, %v58, 0
  %75 = vmatprep.subr.bf16.mxu0 0
  %76 = vmatpush1.bf16.msra.mxu0 %v67
  %77 = vmatprep.subr.bf16.mxu0 0
  %78 = vmatpush1.bf16.msra.mxu0 %v68
  %79 = vmatprep.subr.bf16.mxu0 0
  %80 = vmatpush1.bf16.msra.mxu0 0
  %81 = vmatprep.subr.bf16.mxu0 0
  %82 = vmatpush1.bf16.msra.mxu0 0
  %83 = vmatprep.subr.bf16.mxu0 0
  %84 = vmatpush1.bf16.msra.mxu0 0
  %85 = vmatprep.subr.bf16.mxu0 0
  %86 = vmatpush1.bf16.msra.mxu0 0
  %87 = vmatprep.subr.bf16.mxu0 0
  %88 = vmatpush1.bf16.msra.mxu0 0
  %89 = vmatprep.subr.bf16.mxu0 0
  %90 = vmatpush1.bf16.msra.mxu0 0
  %91 = vmatprep.subr.bf16.mxu0 0
  %92 = vmatpush1.bf16.msra.mxu0 0
  %93 = vmatprep.subr.bf16.mxu0 0
  %94 = vmatpush1.bf16.msra.mxu0 0
  %95 = vmatprep.subr.bf16.mxu0 0
  %96 = vmatpush1.bf16.msra.mxu0 0
  %97 = vmatprep.subr.bf16.mxu0 0
  %98 = vmatpush1.bf16.msra.mxu0 0
  %99 = vmatprep.subr.bf16.mxu0 0
  %100 = vmatpush1.bf16.msra.mxu0 0
  %101 = vmatprep.subr.bf16.mxu0 0
  %102 = vmatpush1.bf16.msra.mxu0 0
  %103 = vmatprep.subr.bf16.mxu0 0
  %104 = vmatpush1.bf16.msra.mxu0 0
  %105 = vmatprep.subr.bf16.mxu0 0
  %106 = vmatpush1.bf16.msra.mxu0 0
  %107 = vmatprep.mubr.bf16.mxu0 0
  %108 = vmatmul.mubr.bf16.gmra.mrb[0].mxu0 %v73
  %v109 = vpop.f32.mrb[0].mxu0
  %v110 = vadd.f32 %v52, %v109
  %v111 = vpop.f32.mrb[0].mxu0
  %v112 = vpop.f32.mrb[0].mxu0
  %v113 = vadd.f32 %v52, %v112
  %v114 = vpop.f32.mrb[0].mxu0
  %115 = vdwg.mxu0
  %v116 = vmax.f32 %v110, 0.0
  %v117 = vmax.f32 %v113, 0.0
  %v118 = vpack.c.bf16 %v117, %v116
  %v119 = vld [vmem:[%s3] sm:$0xf]
  %v120 = vld [vmem:[%s3 + $0x4] sm:$0xf]
  %v121 = vld [vmem:[%s3 + $0x8] sm:$0xf]
  %v122 = vld [vmem:[%s3 + $0xc] sm:$0xf]
  %v123 = vld [vmem:[%s3 + $0x10] sm:$0xf]
  %v124 = vld [vmem:[%s3 + $0x14] sm:$0xf]
  %v125 = vld [vmem:[%s3 + $0x18] sm:$0xf]
  %v126 = vld [vmem:[%s3 + $0x1c] sm:$0xf]
  %v127 = vld [vmem:[%s3 + $0x20] sm:$0xf]
  %v128 = vld [vmem:[%s3 + $0x24] sm:$0xf]
  %v129 = vld [vmem:[%s3 + $0x28] sm:$0xf]
  %v130 = vld [vmem:[%s3 + $0x2c] sm:$0xf]
  %v131 = vld [vmem:[%s3 + $0x30] sm:$0xf]
  %v132 = vld [vmem:[%s3 + $0x34] sm:$0xf]
  %v133 = vld [vmem:[%s3 + $0x38] sm:$0xf]
  %v134 = vld [vmem:[%s3 + $0x3c] sm:$0xf]
  %v135 = vld [vmem:[%s4] sm:$0x1]
  %v137 = vlaneseq
  %v138 = vshrl.u32 %v137, 7
  %v139 = vsub.s32 0, %v138
  %v140 = vrot.slane %v135, %v139
  %v158 = vunpack.c.l.b16 %v119
  %v159 = vunpack.c.l.b16 %v120
  %v160 = vunpack.c.l.b16 %v121
  %v161 = vunpack.c.l.b16 %v122
  %v162 = vunpack.c.l.b16 %v123
  %v163 = vunpack.c.l.b16 %v124
  %v164 = vunpack.c.l.b16 %v125
  %v165 = vunpack.c.l.b16 %v126
  %v166 = vunpack.c.l.b16 %v127
  %v167 = vunpack.c.l.b16 %v128
  %v168 = vunpack.c.l.b16 %v129
  %v169 = vunpack.c.l.b16 %v130
  %v170 = vunpack.c.l.b16 %v131
  %v171 = vunpack.c.l.b16 %v132
  %v172 = vunpack.c.l.b16 %v133
  %v173 = vunpack.c.l.b16 %v134
  %v174 = vpack.c.b16 %v159, %v158
  %v175 = vpack.c.b16 %v161, %v160
  %v176 = vpack.c.b16 %v163, %v162
  %v177 = vpack.c.b16 %v165, %v164
  %v178 = vpack.c.b16 %v167, %v166
  %v179 = vpack.c.b16 %v169, %v168
  %v180 = vpack.c.b16 %v171, %v170
  %v181 = vpack.c.b16 %v173, %v172
  %190 = vmatprep.subr.bf16.mxu0 0
  %191 = vmatpush1.bf16.msra.mxu0 %v174
  %192 = vmatprep.subr.bf16.mxu0 0
  %193 = vmatpush1.bf16.msra.mxu0 %v175
  %194 = vmatprep.subr.bf16.mxu0 0
  %195 = vmatpush1.bf16.msra.mxu0 %v176
  %196 = vmatprep.subr.bf16.mxu0 0
  %197 = vmatpush1.bf16.msra.mxu0 %v177
  %198 = vmatprep.subr.bf16.mxu0 0
  %199 = vmatpush1.bf16.msra.mxu0 %v178
  %200 = vmatprep.subr.bf16.mxu0 0
  %201 = vmatpush1.bf16.msra.mxu0 %v179
  %202 = vmatprep.subr.bf16.mxu0 0
  %203 = vmatpush1.bf16.msra.mxu0 %v180
  %204 = vmatprep.subr.bf16.mxu0 0
  %205 = vmatpush1.bf16.msra.mxu0 %v181
  %206 = vmatprep.subr.bf16.mxu0 0
  %207 = vmatpush1.bf16.msra.mxu0 0
  %208 = vmatprep.subr.bf16.mxu0 0
  %209 = vmatpush1.bf16.msra.mxu0 0
  %210 = vmatprep.subr.bf16.mxu0 0
  %211 = vmatpush1.bf16.msra.mxu0 0
  %212 = vmatprep.subr.bf16.mxu0 0
  %213 = vmatpush1.bf16.msra.mxu0 0
  %214 = vmatprep.subr.bf16.mxu0 0
  %215 = vmatpush1.bf16.msra.mxu0 0
  %216 = vmatprep.subr.bf16.mxu0 0
  %217 = vmatpush1.bf16.msra.mxu0 0
  %218 = vmatprep.subr.bf16.mxu0 0
  %219 = vmatpush1.bf16.msra.mxu0 0
  %220 = vmatprep.subr.bf16.mxu0 0
  %221 = vmatpush1.bf16.msra.mxu0 0
  %222 = vmatprep.mubr.bf16.mxu0 0
  %223 = vmatmul.mubr.bf16.gmra.mrb[0].mxu0 %v118
  %v224 = vpop.f32.mrb[0].mxu0
  %v225 = vadd.f32 %v140, %v224
  %v226 = vpop.f32.mrb[0].mxu0
  %v227 = vpop.f32.mrb[0].mxu0
  %v228 = vadd.f32 %v140, %v227
  %v229 = vpop.f32.mrb[0].mxu0
  %230 = vdwg.mxu0
  %v231 = vmax.f32 %v225, 0.0
  %v232 = vmax.f32 %v228, 0.0
  %v233 = vpack.c.bf16 %v232, %v231
  %v234 = vld [vmem:[%s5] sm:$0xf]
  %v235 = vld [vmem:[%s5 + $0x4] sm:$0xf]
  %v236 = vld [vmem:[%s5 + $0x8] sm:$0xf]
  %v237 = vld [vmem:[%s5 + $0xc] sm:$0xf]
  %v238 = vld [vmem:[%s5 + $0x10] sm:$0xf]
  %v239 = vld [vmem:[%s5 + $0x14] sm:$0xf]
  %v240 = vld [vmem:[%s5 + $0x18] sm:$0xf]
  %v241 = vld [vmem:[%s5 + $0x1c] sm:$0xf]
  %v242 = vld [vmem:[%s6] sm:$0x1]
  %v244 = vlaneseq
  %v245 = vshrl.u32 %v244, 7
  %v246 = vsub.s32 0, %v245
  %v247 = vrot.slane %v242, %v246
  %v257 = vunpack.c.l.b16 %v234
  %v258 = vunpack.c.l.b16 %v235
  %v259 = vunpack.c.l.b16 %v236
  %v260 = vunpack.c.l.b16 %v237
  %v261 = vunpack.c.l.b16 %v238
  %v262 = vunpack.c.l.b16 %v239
  %v263 = vunpack.c.l.b16 %v240
  %v264 = vunpack.c.l.b16 %v241
  %v265 = vpack.c.b16 %v258, %v257
  %v266 = vpack.c.b16 %v260, %v259
  %v267 = vpack.c.b16 %v262, %v261
  %v268 = vpack.c.b16 %v264, %v263
  %vm273 = vcmask 523264
  %v275 = vsel %vm273, %v233, 0
  %277 = vmatprep.subr.bf16.mxu0 0
  %278 = vmatpush1.bf16.msra.mxu0 %v265
  %279 = vmatprep.subr.bf16.mxu0 0
  %280 = vmatpush1.bf16.msra.mxu0 %v266
  %281 = vmatprep.subr.bf16.mxu0 0
  %282 = vmatpush1.bf16.msra.mxu0 %v267
  %283 = vmatprep.subr.bf16.mxu0 0
  %284 = vmatpush1.bf16.msra.mxu0 %v268
  %285 = vmatprep.subr.bf16.mxu0 0
  %286 = vmatpush1.bf16.msra.mxu0 0
  %287 = vmatprep.subr.bf16.mxu0 0
  %288 = vmatpush1.bf16.msra.mxu0 0
  %289 = vmatprep.subr.bf16.mxu0 0
  %290 = vmatpush1.bf16.msra.mxu0 0
  %291 = vmatprep.subr.bf16.mxu0 0
  %292 = vmatpush1.bf16.msra.mxu0 0
  %293 = vmatprep.subr.bf16.mxu0 0
  %294 = vmatpush1.bf16.msra.mxu0 0
  %295 = vmatprep.subr.bf16.mxu0 0
  %296 = vmatpush1.bf16.msra.mxu0 0
  %297 = vmatprep.subr.bf16.mxu0 0
  %298 = vmatpush1.bf16.msra.mxu0 0
  %299 = vmatprep.subr.bf16.mxu0 0
  %300 = vmatpush1.bf16.msra.mxu0 0
  %301 = vmatprep.subr.bf16.mxu0 0
  %302 = vmatpush1.bf16.msra.mxu0 0
  %303 = vmatprep.subr.bf16.mxu0 0
  %304 = vmatpush1.bf16.msra.mxu0 0
  %305 = vmatprep.subr.bf16.mxu0 0
  %306 = vmatpush1.bf16.msra.mxu0 0
  %307 = vmatprep.subr.bf16.mxu0 0
  %308 = vmatpush1.bf16.msra.mxu0 0
  %309 = vmatprep.mubr.bf16.mxu0 0
  %310 = vmatmul.mubr.bf16.gmra.mrb[0].mxu0 %v275
  %v311 = vpop.f32.mrb[0].mxu0
  %v312 = vadd.f32 %v247, %v311
  %v313 = vpop.f32.mrb[0].mxu0
  %v314 = vpop.f32.mrb[0].mxu0
  %v315 = vadd.f32 %v247, %v314
  %v316 = vpop.f32.mrb[0].mxu0
  %317 = vdwg.mxu0
  %v318 = vmax.f32 %v312, 0.0
  %v319 = vmax.f32 %v315, 0.0
  %v320 = vpack.c.bf16 %v319, %v318
  %v321 = vld [vmem:[%s7] sm:$0xf]
  %v322 = vld [vmem:[%s7 + $0x4] sm:$0xf]
  %v323 = vld [vmem:[%s7 + $0x8] sm:$0xf]
  %v324 = vld [vmem:[%s7 + $0xc] sm:$0xf]
  %v325 = vld [vmem:[%s8] sm:$0x1]
  %v327 = vlaneseq
  %v328 = vshrl.u32 %v327, 7
  %v329 = vsub.s32 0, %v328
  %v330 = vrot.slane %v325, %v329
  %v336 = vunpack.c.l.b16 %v321
  %v337 = vunpack.c.l.b16 %v322
  %v338 = vunpack.c.l.b16 %v323
  %v339 = vunpack.c.l.b16 %v324
  %v340 = vpack.c.b16 %v337, %v336
  %v341 = vpack.c.b16 %v339, %v338
  %v345 = vsel %vm71, %v320, 0
  %347 = vmatprep.subr.bf16.mxu0 0
  %348 = vmatpush1.bf16.msra.mxu0 %v340
  %349 = vmatprep.subr.bf16.mxu0 0
  %350 = vmatpush1.bf16.msra.mxu0 %v341
  %351 = vmatprep.subr.bf16.mxu0 0
  %352 = vmatpush1.bf16.msra.mxu0 0
  %353 = vmatprep.subr.bf16.mxu0 0
  %354 = vmatpush1.bf16.msra.mxu0 0
  %355 = vmatprep.subr.bf16.mxu0 0
  %356 = vmatpush1.bf16.msra.mxu0 0
  %357 = vmatprep.subr.bf16.mxu0 0
  %358 = vmatpush1.bf16.msra.mxu0 0
  %359 = vmatprep.subr.bf16.mxu0 0
  %360 = vmatpush1.bf16.msra.mxu0 0
  %361 = vmatprep.subr.bf16.mxu0 0
  %362 = vmatpush1.bf16.msra.mxu0 0
  %363 = vmatprep.subr.bf16.mxu0 0
  %364 = vmatpush1.bf16.msra.mxu0 0
  %365 = vmatprep.subr.bf16.mxu0 0
  %366 = vmatpush1.bf16.msra.mxu0 0
  %367 = vmatprep.subr.bf16.mxu0 0
  %368 = vmatpush1.bf16.msra.mxu0 0
  %369 = vmatprep.subr.bf16.mxu0 0
  %370 = vmatpush1.bf16.msra.mxu0 0
  %371 = vmatprep.subr.bf16.mxu0 0
  %372 = vmatpush1.bf16.msra.mxu0 0
  %373 = vmatprep.subr.bf16.mxu0 0
  %374 = vmatpush1.bf16.msra.mxu0 0
  %375 = vmatprep.subr.bf16.mxu0 0
  %376 = vmatpush1.bf16.msra.mxu0 0
  %377 = vmatprep.subr.bf16.mxu0 0
  %378 = vmatpush1.bf16.msra.mxu0 0
  %379 = vmatprep.mubr.bf16.mxu0 0
  %380 = vmatmul.mubr.bf16.gmra.mrb[0].mxu0 %v345
  %v381 = vpop.f32.mrb[0].mxu0
  %v382 = vadd.f32 %v330, %v381
  %v383 = vpop.f32.mrb[0].mxu0
  %v384 = vpop.f32.mrb[0].mxu0
  %v385 = vadd.f32 %v330, %v384
  %v386 = vpop.f32.mrb[0].mxu0
  %387 = vdwg.mxu0
  %v388 = vmax.f32 %v382, 0.0
  %v389 = vmax.f32 %v385, 0.0
  %v390 = vld [vmem:[%s9] sm:$0x1]
  %v392 = vlaneseq
  %v393 = vshrl.u32 %v392, 7
  %v394 = vsub.s32 0, %v393
  %v395 = vrot.slane %v390, %v394
  %v397 = vmul.f32 %v388, %v395
  %v398 = vmul.f32 %v389, %v395
  %vm399 = vcmask 130048
  %v400 = vsel %vm399, %v397, 0.0
  %401 = vadd.xlane.f32.xlu0 %v400
  %v402 = vpop.xlane.xlu0 %401
  %v403 = vsel %vm399, %v398, 0.0
  %404 = vadd.xlane.f32.xlu0 %v403
  %v405 = vpop.xlane.xlu0 %404
  %v406 = vld [vmem:[#allocation2] sm:$0x1]
  %v408 = vlaneseq
  %v409 = vshrl.u32 %v408, 7
  %v410 = vsub.s32 0, %v409
  %v411 = vrot.slane %v406, %v410
  %v413 = vadd.f32 %v402, %v411
  %v414 = vadd.f32 %v405, %v411
  %vm415 = vcmask 7168
  %416 = vst.msk [vmem:[%s11] sm:$0xff] %vm415, %v413
  %417 = vst.msk [vmem:[%s11 + $0x8] sm:$0xff] %vm415, %v414
  // Predicated region
  $region46: #{simplenn_forward.1} parent=0 // pred_check
    _
  $region47: #{simplenn_forward.1} parent=0 // pred_check_branch
    %419 = sbr.rel (0) target = $region49
  $region48: #{simplenn_forward.1} parent=0 // pred_region
    _
  $region49: #{simplenn_forward.1} parent=0 // pred_fallthru
    _
  // Predicated region
  $region50: #{simplenn_forward.1} parent=0 // pred_check
    _
  $region51: #{simplenn_forward.1} parent=0 // pred_check_branch
    %421 = sbr.rel (0) target = $region53
  $region52: #{simplenn_forward.1} parent=0 // pred_region
    _
  $region53: #{simplenn_forward.1} parent=0 // pred_fallthru
    _

</llo_original>
